<compile_context>
chip_gen: v7x
topology: tpu7x:2x2x1
jax: 0.10.0
libtpu: 0.0.40
codegen_flags: <defaults>
</compile_context>

<pallas_src>
import functools

import jax
import jax.numpy as jnp
from jax import lax
from jax.experimental import pallas as pl
from jax.experimental.pallas import tpu as pltpu
from jax.scipy.linalg import block_diag


def _aem_kernel(Bb, HW, C,
                xcol_ref, w3_ref, xspec_ref, w1_ref, w2t_ref, b2_ref, y_ref):
    """One grid step processes Bb batch elements.

    xcol_ref  : [1, Bb*HW, 9C+1]  im2col rows (batch-major) + ones col (b3 fold)
    w3_ref    : [9C+1, C]         3x3 conv weight with bias row appended
    xspec_ref : [1, HW+1, Bb*C]   x, spatial-major, batch packed in lanes,
                                  + ones row (b1 fold)
    w1_ref    : [HW, HW+1]        conv1 weight with bias column appended
    w2t_ref   : [Bb*C, Bb*C]      kron(I_Bb, blockdiag(w21, w22, ...)^T)
    b2_ref    : [1, Bb*C]         concat of group biases, tiled Bb times
    y_ref     : [1, HW, Bb*C]
    """
    # ---- attention weights: softmax over channels of relu(conv3x3(x) + b3) ----
    conv = jnp.dot(xcol_ref[0], w3_ref[...],
                   preferred_element_type=jnp.float32)              # [Bb*HW, C]
    conv = jnp.maximum(conv, 0.0)
    m = jnp.max(conv, axis=-1, keepdims=True)
    e = jnp.exp(conv - m)
    wt_bm = e * pl.reciprocal(jnp.sum(e, axis=-1, keepdims=True), approx=True)
    # single relayout: batch-major rows -> spatial-major rows, batch in lanes
    wt = jnp.concatenate([wt_bm[b * HW:(b + 1) * HW, :] for b in range(Bb)],
                         axis=-1)                                   # [HW, Bb*C]

    # ---- fused spectral branch: relu(W2 . relu(w1 @ x + b1) + b2) ----
    h = jnp.maximum(jnp.dot(w1_ref[...], xspec_ref[0],
                            preferred_element_type=jnp.float32), 0.0)   # [HW, Bb*C]
    spec = jnp.maximum(jnp.dot(h, w2t_ref[...],
                               preferred_element_type=jnp.float32)
                       + b2_ref[...], 0.0)                              # [HW, Bb*C]

    y_ref[0] = wt * spec


def _pick_batch_block(B, C, max_lanes=512):
    """Largest batch block Bb | B with Bb*C <= max_lanes, keeping >=2 grid steps
    when possible (v7x has 2 TensorCores)."""
    divs = [d for d in range(1, B + 1) if B % d == 0 and d * C <= max_lanes]
    if not divs:
        return 1
    pref = [d for d in divs if B // d >= 2]
    return max(pref) if pref else max(divs)


def aem_forward(x_nchw, params, spec_range, slice_size, batch_block=None):
    B, C, H, W = x_nchw.shape
    S = slice_size
    assert H == S and W == S
    HW = S * S
    assert spec_range[-1] == C, "spectral groups must cover all channels"
    sizes = [spec_range[0]] + [spec_range[g] - spec_range[g - 1]
                               for g in range(1, len(spec_range))]
    w2s, b2s = params['w2s'], params['b2s']
    assert len(w2s) == len(sizes) and [w.shape[0] for w in w2s] == sizes

    Bb = batch_block if batch_block is not None else _pick_batch_block(B, C)
    assert B % Bb == 0
    NB = B // Bb
    f32 = jnp.float32

    x_nhwc = jnp.transpose(x_nchw, (0, 2, 3, 1)).astype(f32)        # NCHW -> NHWC

    # --- im2col for the 3x3 conv (batch-major rows); conv bias folded in -------
    xpad = jnp.pad(x_nhwc, ((0, 0), (1, 1), (1, 1), (0, 0)))
    taps = [xpad[:, di:di + S, dj:dj + S, :] for di in range(3) for dj in range(3)]
    x_col = jnp.stack(taps, axis=3).reshape(B, HW, 9 * C)           # col = k*C + ci
    x_col = x_col.reshape(NB, Bb * HW, 9 * C)
    x_col = jnp.concatenate([x_col, jnp.ones((NB, Bb * HW, 1), f32)], axis=-1)
    w3_aug = jnp.concatenate([params['w3'].reshape(9 * C, C).astype(f32),
                              params['b3'].astype(f32)], axis=0)    # [9C+1, C]

    # --- spatial-major, batch-in-lanes view of x for the fused conv1 matmul ----
    x_sm = (x_nhwc.reshape(NB, Bb, HW, C)
            .transpose(0, 2, 1, 3).reshape(NB, HW, Bb * C))
    x_sm = jnp.concatenate([x_sm, jnp.ones((NB, 1, Bb * C), f32)], axis=1)  # b1 fold
    w1_aug = jnp.concatenate([params['w1'].astype(f32),
                              params['b1'].astype(f32)], axis=1)    # [HW, HW+1]

    # --- fused, pre-transposed second-layer weight (block-diag over groups/batch)
    w2_blk = block_diag(*[w.astype(f32) for w in w2s])              # [C, C]
    w2_bigT = jnp.kron(jnp.eye(Bb, dtype=f32), w2_blk.T)            # [Bb*C, Bb*C]
    b2_big = jnp.tile(
        jnp.concatenate([b.astype(f32).reshape(1, -1) for b in b2s], axis=1),
        (1, Bb))                                                    # [1, Bb*C]

    kernel = functools.partial(_aem_kernel, Bb, HW, C)

    block_bytes = 4 * (Bb * HW * (9 * C + 1) + (9 * C + 1) * C
                       + (HW + 1) * Bb * C + HW * (HW + 1)
                       + (Bb * C) ** 2 + Bb * C + HW * Bb * C)
    vmem_limit = int(min(100 * 2 ** 20, max(16 * 2 ** 20, 4 * block_bytes)))

    y = pl.pallas_call(
        kernel,
        out_shape=jax.ShapeDtypeStruct((NB, HW, Bb * C), f32),
        grid=(NB,),
        in_specs=[
            pl.BlockSpec((1, Bb * HW, 9 * C + 1), lambda nb: (nb, 0, 0)),
            pl.BlockSpec((9 * C + 1, C),          lambda nb: (0, 0)),
            pl.BlockSpec((1, HW + 1, Bb * C),     lambda nb: (nb, 0, 0)),
            pl.BlockSpec((HW, HW + 1),            lambda nb: (0, 0)),
            pl.BlockSpec((Bb * C, Bb * C),        lambda nb: (0, 0)),
            pl.BlockSpec((1, Bb * C),             lambda nb: (0, 0)),
        ],
        out_specs=pl.BlockSpec((1, HW, Bb * C), lambda nb: (nb, 0, 0)),
        compiler_params=pltpu.CompilerParams(
            dimension_semantics=("parallel",),
            vmem_limit_bytes=vmem_limit),
    )(x_col, w3_aug, x_sm, w1_aug, w2_bigT, b2_big)

    # [NB, HW, Bb*C] -> [B, S, S, C] -> NCHW   (XLA layout glue)
    y = y.reshape(NB, HW, Bb, C).transpose(0, 2, 1, 3).reshape(B, S, S, C)
    return jnp.transpose(y, (0, 3, 1, 2))


def aem_ref(x_nchw, params, spec_range, S):
    """Pure-JAX reference of the same forward semantics (for validation)."""
    B, C, H, W = x_nchw.shape
    x_nhwc = jnp.transpose(x_nchw, (0, 2, 3, 1))
    w3 = params['w3'].reshape(3, 3, C, C)                            # HWIO
    conv = lax.conv_general_dilated(
        x_nhwc, w3, (1, 1), 'SAME',
        dimension_numbers=('NHWC', 'HWIO', 'NHWC')) + params['b3'][0]
    wt = jax.nn.softmax(jnp.maximum(conv, 0.0), axis=-1)             # softmax over C
    xf = x_nhwc.reshape(B, S * S, C)
    outs, start = [], 0
    for g, end in enumerate(spec_range):
        xg = xf[:, :, start:end]
        h = jnp.maximum(jnp.einsum('pq,bqc->bpc', params['w1'], xg)
                        + params['b1'][None], 0.0)
        s = jnp.maximum(jnp.einsum('bpc,dc->bpd', h, params['w2s'][g])
                        + params['b2s'][g][0], 0.0)
        outs.append(s)
        start = end
    spec = jnp.concatenate(outs, axis=-1)
    y = wt.reshape(B, S * S, C) * spec
    return jnp.transpose(y.reshape(B, S, S, C), (0, 3, 1, 2))


if __name__ == "__main__":
    B, C, S = 4, 4, 8          # batch, in_ch, slice_size (spatial = S x S)
    spec_range = [2, 4]        # two spectral groups of 2 channels each
    HW = S * S
    c_sizes = [spec_range[0], spec_range[1] - spec_range[0]]

    key = jax.random.PRNGKey(0)
    ks = jax.random.split(key, 9)
    params = {
        'w3':  jax.random.normal(ks[0], (9, C, C), jnp.float32) * 0.1,
        'b3':  jax.random.normal(ks[1], (1, C), jnp.float32) * 0.1,
        'w1':  jax.random.normal(ks[2], (HW, HW), jnp.float32) * 0.05,
        'b1':  jax.random.normal(ks[3], (HW, 1), jnp.float32) * 0.1,
        'w2s': [jax.random.normal(ks[4], (c_sizes[0], c_sizes[0]), jnp.float32) * 0.1,
                jax.random.normal(ks[5], (c_sizes[1], c_sizes[1]), jnp.float32) * 0.1],
        'b2s': [jax.random.normal(ks[6], (1, c_sizes[0]), jnp.float32) * 0.1,
                jax.random.normal(ks[7], (1, c_sizes[1]), jnp.float32) * 0.1],
    }
    x = jax.random.normal(ks[8], (B, C, S, S), jnp.float32)          # NCHW input

    y = aem_forward(x, params, spec_range, S)
    jax.block_until_ready(y)

    y_ref = aem_ref(x, params, spec_range, S)
    assert y.shape == (B, C, S, S)
    err = float(jnp.max(jnp.abs(y - y_ref)))
    # approx reciprocal in the softmax denominator loosens tolerance to ~1e-3
    assert jnp.allclose(y, y_ref, atol=2e-3, rtol=2e-3), err
    print("KERNEL_OK")
</pallas_src>

<mosaic_0001>
module attributes {stable_mosaic.version = 11 : i64} {
  func.func @_aem_kernel(%arg0: i32, %arg1: memref<1x128x37xf32, #tpu.memory_space<vmem>>, %arg2: memref<37x4xf32, #tpu.memory_space<vmem>>, %arg3: memref<1x65x8xf32, #tpu.memory_space<vmem>>, %arg4: memref<64x65xf32, #tpu.memory_space<vmem>>, %arg5: memref<8x8xf32, #tpu.memory_space<vmem>>, %arg6: memref<1x8xf32, #tpu.memory_space<vmem>>, %arg7: memref<1x64x8xf32, #tpu.memory_space<vmem>>) attributes {dimension_semantics = [#tpu.dimension_semantics<parallel>], iteration_bounds = array<i64: 2>, scalar_prefetch = 0 : i64, scratch_operands = 0 : i64, tpu.core_type = #tpu.core_type<tc>, window_params = [{transform_indices = @transform_0, window_bounds = array<i64: 1, 128, 37>}, {pipeline_mode = #tpu.pipeline_mode<synchronous>, transform_indices = @transform_1, window_bounds = array<i64: 37, 4>}, {transform_indices = @transform_2, window_bounds = array<i64: 1, 65, 8>}, {pipeline_mode = #tpu.pipeline_mode<synchronous>, transform_indices = @transform_3, window_bounds = array<i64: 64, 65>}, {pipeline_mode = #tpu.pipeline_mode<synchronous>, transform_indices = @transform_4, window_bounds = array<i64: 8, 8>}, {pipeline_mode = #tpu.pipeline_mode<synchronous>, transform_indices = @transform_5, window_bounds = array<i64: 1, 8>}, {transform_indices = @transform_6, window_bounds = array<i64: 1, 64, 8>}]} {
    %c0 = arith.constant 0 : index
    %c0_0 = arith.constant 0 : index
    %c0_1 = arith.constant 0 : index
    %0 = vector.load %arg1[%c0, %c0_0, %c0_1] : memref<1x128x37xf32, #tpu.memory_space<vmem>>, vector<1x128x37xf32>
    %1 = vector.shape_cast %0 : vector<1x128x37xf32> to vector<128x37xf32>
    %c0_2 = arith.constant 0 : index
    %c0_3 = arith.constant 0 : index
    %2 = vector.load %arg2[%c0_2, %c0_3] : memref<37x4xf32, #tpu.memory_space<vmem>>, vector<37x4xf32>
    %cst = arith.constant dense<0.000000e+00> : vector<128x4xf32>
    %3 = tpu.matmul %1, %2, %cst {dimension_numbers = #tpu.dot_dimension_numbers<[1], [0], [0], [1], [0, 0, 1, 1], [], []>} : vector<128x37xf32>, vector<37x4xf32>, vector<128x4xf32> -> vector<128x4xf32>
    %cst_4 = arith.constant 0.000000e+00 : f32
    %4 = vector.broadcast %cst_4 : f32 to vector<128x4xf32>
    %5 = arith.maximumf %3, %4 : vector<128x4xf32>
    %cst_5 = arith.constant dense<0xFF800000> : vector<128xf32>
    %6 = vector.multi_reduction <maximumf>, %5, %cst_5 [1] : vector<128x4xf32> to vector<128xf32>
    %7 = vector.shape_cast %6 : vector<128xf32> to vector<128x1xf32>
    %8 = vector.broadcast %7 : vector<128x1xf32> to vector<128x4xf32>
    %9 = arith.subf %5, %8 : vector<128x4xf32>
    %10 = math.exp %9 : vector<128x4xf32>
    %cst_6 = arith.constant dense<0.000000e+00> : vector<128xf32>
    %11 = vector.multi_reduction <add>, %10, %cst_6 [1] : vector<128x4xf32> to vector<128xf32>
    %12 = vector.shape_cast %11 : vector<128xf32> to vector<128x1xf32>
    %13 = tpu.reciprocal %12 {approx = true} : vector<128x1xf32> -> vector<128x1xf32>
    %14 = vector.broadcast %13 : vector<128x1xf32> to vector<128x4xf32>
    %15 = arith.mulf %10, %14 : vector<128x4xf32>
    %16 = vector.extract_strided_slice %15 {offsets = [0, 0], sizes = [64, 4], strides = [1, 1]} : vector<128x4xf32> to vector<64x4xf32>
    %17 = vector.extract_strided_slice %15 {offsets = [64, 0], sizes = [64, 4], strides = [1, 1]} : vector<128x4xf32> to vector<64x4xf32>
    %18 = tpu.concatenate %16, %17 in 1 : vector<64x4xf32>, vector<64x4xf32> -> vector<64x8xf32>
    %c0_7 = arith.constant 0 : index
    %c0_8 = arith.constant 0 : index
    %19 = vector.load %arg4[%c0_7, %c0_8] : memref<64x65xf32, #tpu.memory_space<vmem>>, vector<64x65xf32>
    %c0_9 = arith.constant 0 : index
    %c0_10 = arith.constant 0 : index
    %c0_11 = arith.constant 0 : index
    %20 = vector.load %arg3[%c0_9, %c0_10, %c0_11] : memref<1x65x8xf32, #tpu.memory_space<vmem>>, vector<1x65x8xf32>
    %21 = vector.shape_cast %20 : vector<1x65x8xf32> to vector<65x8xf32>
    %cst_12 = arith.constant dense<0.000000e+00> : vector<64x8xf32>
    %22 = tpu.matmul %19, %21, %cst_12 {dimension_numbers = #tpu.dot_dimension_numbers<[1], [0], [0], [1], [0, 0, 1, 1], [], []>} : vector<64x65xf32>, vector<65x8xf32>, vector<64x8xf32> -> vector<64x8xf32>
    %cst_13 = arith.constant 0.000000e+00 : f32
    %23 = vector.broadcast %cst_13 : f32 to vector<64x8xf32>
    %24 = arith.maximumf %22, %23 : vector<64x8xf32>
    %c0_14 = arith.constant 0 : index
    %c0_15 = arith.constant 0 : index
    %25 = vector.load %arg5[%c0_14, %c0_15] : memref<8x8xf32, #tpu.memory_space<vmem>>, vector<8x8xf32>
    %cst_16 = arith.constant dense<0.000000e+00> : vector<64x8xf32>
    %26 = tpu.matmul %24, %25, %cst_16 {dimension_numbers = #tpu.dot_dimension_numbers<[1], [0], [0], [1], [0, 0, 1, 1], [], []>} : vector<64x8xf32>, vector<8x8xf32>, vector<64x8xf32> -> vector<64x8xf32>
    %c0_17 = arith.constant 0 : index
    %c0_18 = arith.constant 0 : index
    %27 = vector.load %arg6[%c0_17, %c0_18] : memref<1x8xf32, #tpu.memory_space<vmem>>, vector<1x8xf32>
    %28 = vector.broadcast %27 : vector<1x8xf32> to vector<64x8xf32>
    %29 = arith.addf %26, %28 : vector<64x8xf32>
    %cst_19 = arith.constant 0.000000e+00 : f32
    %30 = vector.broadcast %cst_19 : f32 to vector<64x8xf32>
    %31 = arith.maximumf %29, %30 : vector<64x8xf32>
    %32 = arith.mulf %18, %31 : vector<64x8xf32>
    %c0_20 = arith.constant 0 : index
    %c0_21 = arith.constant 0 : index
    %c0_22 = arith.constant 0 : index
    %33 = vector.load %arg7[%c0_20, %c0_21, %c0_22] : memref<1x64x8xf32, #tpu.memory_space<vmem>>, vector<1x64x8xf32>
    %34 = vector.shape_cast %33 : vector<1x64x8xf32> to vector<64x8xf32>
    %35 = vector.shape_cast %32 : vector<64x8xf32> to vector<1x64x8xf32>
    tpu.vector_store %arg7[%c0_20, %c0_21, %c0_22], %35 {strides = array<i32>} : memref<1x64x8xf32, #tpu.memory_space<vmem>>, vector<1x64x8xf32>,
    return
  }
  func.func @transform_0(%arg0: i32) -> (i32, i32, i32) {
    %c0_i32 = arith.constant 0 : i32
    %c0_i32_0 = arith.constant 0 : i32
    %c0_i32_1 = arith.constant 0 : i32
    return %arg0, %c0_i32, %c0_i32_0 : i32, i32, i32
  }
  func.func @transform_1(%arg0: i32) -> (i32, i32) {
    %c0_i32 = arith.constant 0 : i32
    %c0_i32_0 = arith.constant 0 : i32
    %c0_i32_1 = arith.constant 0 : i32
    return %c0_i32, %c0_i32_0 : i32, i32
  }
  func.func @transform_2(%arg0: i32) -> (i32, i32, i32) {
    %c0_i32 = arith.constant 0 : i32
    %c0_i32_0 = arith.constant 0 : i32
    %c0_i32_1 = arith.constant 0 : i32
    return %arg0, %c0_i32, %c0_i32_0 : i32, i32, i32
  }
  func.func @transform_3(%arg0: i32) -> (i32, i32) {
    %c0_i32 = arith.constant 0 : i32
    %c0_i32_0 = arith.constant 0 : i32
    %c0_i32_1 = arith.constant 0 : i32
    return %c0_i32, %c0_i32_0 : i32, i32
  }
  func.func @transform_4(%arg0: i32) -> (i32, i32) {
    %c0_i32 = arith.constant 0 : i32
    %c0_i32_0 = arith.constant 0 : i32
    %c0_i32_1 = arith.constant 0 : i32
    return %c0_i32, %c0_i32_0 : i32, i32
  }
  func.func @transform_5(%arg0: i32) -> (i32, i32) {
    %c0_i32 = arith.constant 0 : i32
    %c0_i32_0 = arith.constant 0 : i32
    %c0_i32_1 = arith.constant 0 : i32
    return %c0_i32, %c0_i32_0 : i32, i32
  }
  func.func @transform_6(%arg0: i32) -> (i32, i32, i32) {
    %c0_i32 = arith.constant 0 : i32
    %c0_i32_0 = arith.constant 0 : i32
    %c0_i32_1 = arith.constant 0 : i32
    return %arg0, %c0_i32, %c0_i32_0 : i32, i32, i32
  }
}

</mosaic_0001>

<llo_original>
// kernel: tpu_custom_call.1
$region0: #{tpu_custom_call.1}
  #allocation0 [shape = 'u32[]', space=smem, size = 0x4, offset = 0x4, fixed_abs, tag = 'smem constant byte address 0x4 - core index']
  #allocation1 [shape = 'u32[144,128]{1,0:T(1,128)}', space=vmem, size = 0x12000, scoped, tag = 'internal scratch']
  %s0 = inlined_call_operand.vmem [shape: f32[2,128,37], index: 0, kind: input, shape index: {}]
  %s1 = inlined_call_operand.vmem [shape: f32[37,4], index: 1, kind: input, shape index: {}]
  %s2 = inlined_call_operand.vmem [shape: f32[2,65,8], index: 2, kind: input, shape index: {}]
  %s3 = inlined_call_operand.vmem [shape: f32[64,65], index: 3, kind: input, shape index: {}]
  %s4 = inlined_call_operand.vmem [shape: f32[8,8], index: 4, kind: input, shape index: {}]
  %s5 = inlined_call_operand.vmem [shape: f32[1,8], index: 5, kind: input, shape index: {}]
  %s6 = inlined_call_operand.vmem [shape: f32[2,64,8], index: 6, kind: output, shape index: {}]
  %s7 = sld [smem:[#allocation0]]
  $region57: #{tpu_custom_call.1} parent=0
    _
  %s9 = ssub.s32 1, %s7
  %s10 = scalar_select 0, %s9, %s7
  loop: start=0, step=1, limit=4
  $region2: #{tpu_custom_call.1} parent=0 // loop_pre_header
    _
  $region3: #{tpu_custom_call.1} parent=0 // loop_header
    %s12 = sphi 0, %s16
    %p13 = scmp.ge.s32.totalorder %s12, 4
    %s22 = sphi 0, %s24
    %s25 = sphi 0, %s22
    %s26 = sphi 0, %s25
    %s42 = sphi 0, %s26
    %s46 = sphi 0, %s46
    %s48 = sphi 0, %s46
    %s49 = sphi 0, %s48
    %s63 = sphi 0, %s49
    %s69 = sphi 0, %s71
    %s72 = sphi 0, %s69
    %s73 = sphi 0, %s72
    %s89 = sphi 0, %s73
    %s93 = sphi 0, %s93
    %s95 = sphi 0, %s93
    %s96 = sphi 0, %s95
    %s110 = sphi 0, %s96
    %s114 = sphi 0, %s114
    %s116 = sphi 0, %s114
    %s117 = sphi 0, %s116
    %s131 = sphi 0, %s117
    %s135 = sphi 0, %s135
    %s137 = sphi 0, %s135
    %s138 = sphi 0, %s137
    %s152 = sphi 0, %s138
    %s158 = sphi 0, %s160
    %s161 = sphi 0, %s158
    %s162 = sphi 0, %s161
    %s178 = sphi 0, %s162
  $region4: #{tpu_custom_call.1} parent=0 // loop_header_branch
    %15 = sbr.rel (%p13) target = $region8
  $region5: #{tpu_custom_call.1} parent=0 // loop_body
    %s17 = ssub.s32 %s12, 1
    %s18 = ssub.s32 %s12, 2
    %s19 = sadd.s32 %s12, 1
    %s20 = ssub.s32 %s12, %s19
    %p21 = scmp.eq.s32.totalorder %s20, 0
    %s23 = sadd.s32 %s22, 1
    %s24 = scalar_select %p21, %s22, %s23
    %p27 = pneg %p21
    %p28 = scmp.eq.s32.totalorder %s12, 1
    %p29 = por %p27, %p28
    %p30 = scmp.ne.s32.totalorder %s22, %s25
    %p31 = scmp.eq.s32.totalorder %s12, 0
    %p32 = por %p30, %p31
    %p33 = scmp.ne.s32.totalorder %s22, %s25
    %p34 = scmp.eq.s32.totalorder %s17, 1
    %p35 = por %p33, %p34
    %p36 = scmp.ne.s32.totalorder %s25, %s26
    %p37 = scmp.eq.s32.totalorder %s17, 0
    %p38 = por %p36, %p37
    %p39 = scmp.ne.s32.totalorder %s25, %s26
    %p40 = scmp.eq.s32.totalorder %s18, 1
    %p41 = por %p39, %p40
    %p43 = scmp.ne.s32.totalorder %s26, %s42
    %p44 = scmp.eq.s32.totalorder %s18, 0
    %p45 = por %p43, %p44
    %s47 = sadd.s32 %s46, 1
    %p50 = scmp.eq.s32.totalorder %s12, 1
    %p51 = scmp.ne.s32.totalorder %s46, %s48
    %p52 = scmp.eq.s32.totalorder %s12, 0
    %p53 = por %p51, %p52
    %p54 = scmp.ne.s32.totalorder %s46, %s48
    %p55 = scmp.eq.s32.totalorder %s17, 1
    %p56 = por %p54, %p55
    %p57 = scmp.ne.s32.totalorder %s48, %s49
    %p58 = scmp.eq.s32.totalorder %s17, 0
    %p59 = por %p57, %p58
    %p60 = scmp.ne.s32.totalorder %s48, %s49
    %p61 = scmp.eq.s32.totalorder %s18, 1
    %p62 = por %p60, %p61
    %p64 = scmp.ne.s32.totalorder %s49, %s63
    %p65 = scmp.eq.s32.totalorder %s18, 0
    %p66 = por %p64, %p65
    %s67 = ssub.s32 %s12, %s19
    %p68 = scmp.eq.s32.totalorder %s67, 0
    %s70 = sadd.s32 %s69, 1
    %s71 = scalar_select %p68, %s69, %s70
    %p74 = pneg %p68
    %p75 = scmp.eq.s32.totalorder %s12, 1
    %p76 = por %p74, %p75
    %p77 = scmp.ne.s32.totalorder %s69, %s72
    %p78 = scmp.eq.s32.totalorder %s12, 0
    %p79 = por %p77, %p78
    %p80 = scmp.ne.s32.totalorder %s69, %s72
    %p81 = scmp.eq.s32.totalorder %s17, 1
    %p82 = por %p80, %p81
    %p83 = scmp.ne.s32.totalorder %s72, %s73
    %p84 = scmp.eq.s32.totalorder %s17, 0
    %p85 = por %p83, %p84
    %p86 = scmp.ne.s32.totalorder %s72, %s73
    %p87 = scmp.eq.s32.totalorder %s18, 1
    %p88 = por %p86, %p87
    %p90 = scmp.ne.s32.totalorder %s73, %s89
    %p91 = scmp.eq.s32.totalorder %s18, 0
    %p92 = por %p90, %p91
    %s94 = sadd.s32 %s93, 1
    %p97 = scmp.eq.s32.totalorder %s12, 1
    %p98 = scmp.ne.s32.totalorder %s93, %s95
    %p99 = scmp.eq.s32.totalorder %s12, 0
    %p100 = por %p98, %p99
    %p101 = scmp.ne.s32.totalorder %s93, %s95
    %p102 = scmp.eq.s32.totalorder %s17, 1
    %p103 = por %p101, %p102
    %p104 = scmp.ne.s32.totalorder %s95, %s96
    %p105 = scmp.eq.s32.totalorder %s17, 0
    %p106 = por %p104, %p105
    %p107 = scmp.ne.s32.totalorder %s95, %s96
    %p108 = scmp.eq.s32.totalorder %s18, 1
    %p109 = por %p107, %p108
    %p111 = scmp.ne.s32.totalorder %s96, %s110
    %p112 = scmp.eq.s32.totalorder %s18, 0
    %p113 = por %p111, %p112
    %s115 = sadd.s32 %s114, 1
    %p118 = scmp.eq.s32.totalorder %s12, 1
    %p119 = scmp.ne.s32.totalorder %s114, %s116
    %p120 = scmp.eq.s32.totalorder %s12, 0
    %p121 = por %p119, %p120
    %p122 = scmp.ne.s32.totalorder %s114, %s116
    %p123 = scmp.eq.s32.totalorder %s17, 1
    %p124 = por %p122, %p123
    %p125 = scmp.ne.s32.totalorder %s116, %s117
    %p126 = scmp.eq.s32.totalorder %s17, 0
    %p127 = por %p125, %p126
    %p128 = scmp.ne.s32.totalorder %s116, %s117
    %p129 = scmp.eq.s32.totalorder %s18, 1
    %p130 = por %p128, %p129
    %p132 = scmp.ne.s32.totalorder %s117, %s131
    %p133 = scmp.eq.s32.totalorder %s18, 0
    %p134 = por %p132, %p133
    %s136 = sadd.s32 %s135, 1
    %p139 = scmp.eq.s32.totalorder %s12, 1
    %p140 = scmp.ne.s32.totalorder %s135, %s137
    %p141 = scmp.eq.s32.totalorder %s12, 0
    %p142 = por %p140, %p141
    %p143 = scmp.ne.s32.totalorder %s135, %s137
    %p144 = scmp.eq.s32.totalorder %s17, 1
    %p145 = por %p143, %p144
    %p146 = scmp.ne.s32.totalorder %s137, %s138
    %p147 = scmp.eq.s32.totalorder %s17, 0
    %p148 = por %p146, %p147
    %p149 = scmp.ne.s32.totalorder %s137, %s138
    %p150 = scmp.eq.s32.totalorder %s18, 1
    %p151 = por %p149, %p150
    %p153 = scmp.ne.s32.totalorder %s138, %s152
    %p154 = scmp.eq.s32.totalorder %s18, 0
    %p155 = por %p153, %p154
    %s156 = ssub.s32 %s12, %s19
    %p157 = scmp.eq.s32.totalorder %s156, 0
    %s159 = sadd.s32 %s158, 1
    %s160 = scalar_select %p157, %s158, %s159
    %p163 = pneg %p157
    %p164 = scmp.eq.s32.totalorder %s12, 1
    %p165 = por %p163, %p164
    %p166 = scmp.ne.s32.totalorder %s158, %s161
    %p167 = scmp.eq.s32.totalorder %s12, 0
    %p168 = por %p166, %p167
    %p169 = scmp.ne.s32.totalorder %s158, %s161
    %p170 = scmp.eq.s32.totalorder %s17, 1
    %p171 = por %p169, %p170
    %p172 = scmp.ne.s32.totalorder %s161, %s162
    %p173 = scmp.eq.s32.totalorder %s17, 0
    %p174 = por %p172, %p173
    %p175 = scmp.ne.s32.totalorder %s161, %s162
    %p176 = scmp.eq.s32.totalorder %s18, 1
    %p177 = por %p175, %p176
    %p179 = scmp.ne.s32.totalorder %s162, %s178
    %p180 = scmp.eq.s32.totalorder %s18, 0
    %p181 = por %p179, %p180
    %p182 = scmp.le.s32.totalorder 1, %s12
    %p183 = scmp.lt.s32.totalorder %s12, 3
    %p184 = pnand %p182, %p183
    %p185 = pneg %p184
    // Predicated region
    $region9: #{tpu_custom_call.1} parent=5 // pred_check
      _
    $region10: #{tpu_custom_call.1} parent=5 // pred_check_branch
      %187 = sbr.rel (%p184) target = $region12
    $region11: #{tpu_custom_call.1} parent=5 // pred_region
      %s188 = ssub.s32 %s12, 1
      // Predicated region
      $region13: #{tpu_custom_call.1} parent=11 // pred_check
        %p189 = pneg %p59
      $region14: #{tpu_custom_call.1} parent=11 // pred_check_branch
        %191 = sbr.rel (%p189) target = $region16
      $region15: #{tpu_custom_call.1} parent=11 // pred_region
        _
      $region16: #{tpu_custom_call.1} parent=11 // pred_fallthru
        _
      // Predicated region
      $region17: #{tpu_custom_call.1} parent=11 // pred_check
        %p192 = pneg %p106
      $region18: #{tpu_custom_call.1} parent=11 // pred_check_branch
        %194 = sbr.rel (%p192) target = $region20
      $region19: #{tpu_custom_call.1} parent=11 // pred_region
        _
      $region20: #{tpu_custom_call.1} parent=11 // pred_fallthru
        _
      // Predicated region
      $region21: #{tpu_custom_call.1} parent=11 // pred_check
        %p195 = pneg %p127
      $region22: #{tpu_custom_call.1} parent=11 // pred_check_branch
        %197 = sbr.rel (%p195) target = $region24
      $region23: #{tpu_custom_call.1} parent=11 // pred_region
        _
      $region24: #{tpu_custom_call.1} parent=11 // pred_fallthru
        _
      // Predicated region
      $region25: #{tpu_custom_call.1} parent=11 // pred_check
        %p198 = pneg %p148
      $region26: #{tpu_custom_call.1} parent=11 // pred_check_branch
        %200 = sbr.rel (%p198) target = $region28
      $region27: #{tpu_custom_call.1} parent=11 // pred_region
        _
      $region28: #{tpu_custom_call.1} parent=11 // pred_fallthru
        _
    $region12: #{tpu_custom_call.1} parent=5 // pred_fallthru
      _
    %p201 = scmp.lt.s32.totalorder %s12, 2
    // Predicated region
    $region29: #{tpu_custom_call.1} parent=5 // pred_check
      %p202 = pneg %p201
    $region30: #{tpu_custom_call.1} parent=5 // pred_check_branch
      %204 = sbr.rel (%p202) target = $region32
    $region31: #{tpu_custom_call.1} parent=5 // pred_region
      // Predicated region
      $region33: #{tpu_custom_call.1} parent=31 // pred_check
        %p205 = pneg %p32
      $region34: #{tpu_custom_call.1} parent=31 // pred_check_branch
        %207 = sbr.rel (%p205) target = $region36
      $region35: #{tpu_custom_call.1} parent=31 // pred_region
        %p208 = scmp.lt.s32.totalorder %s12, 1
        %s209 = scalar_select %p208, %s12, 1
        %s210 = smul.addr %s209, 16
        %s211 = smul.addr %s210, 8
        %s212 = scalar_lea.vmem %s0, %s211
      $region36: #{tpu_custom_call.1} parent=31 // pred_fallthru
        _
      // Predicated region
      $region37: #{tpu_custom_call.1} parent=31 // pred_check
        %p213 = pneg %p79
      $region38: #{tpu_custom_call.1} parent=31 // pred_check_branch
        %215 = sbr.rel (%p213) target = $region40
      $region39: #{tpu_custom_call.1} parent=31 // pred_region
        %p216 = scmp.lt.s32.totalorder %s12, 1
        %s217 = scalar_select %p216, %s12, 1
        %s218 = smul.addr %s217, 9
        %s219 = smul.addr %s218, 8
        %s220 = scalar_lea.vmem %s2, %s219
      $region40: #{tpu_custom_call.1} parent=31 // pred_fallthru
        _
    $region32: #{tpu_custom_call.1} parent=5 // pred_fallthru
      _
    %p221 = scmp.le.s32.totalorder 1, %s12
    %p222 = scmp.lt.s32.totalorder %s12, 3
    %p223 = pnand %p221, %p222
    %p224 = pneg %p223
    // Predicated region
    $region41: #{tpu_custom_call.1} parent=5 // pred_check
      _
    $region42: #{tpu_custom_call.1} parent=5 // pred_check_branch
      %226 = sbr.rel (%p223) target = $region44
    $region43: #{tpu_custom_call.1} parent=5 // pred_region
      %s227 = ssub.s32 %s12, 1
      %p228 = scmp.lt.s32.totalorder %s17, 1
      %s229 = scalar_select %p228, %s17, 1
      %s230 = smul.addr %s229, 16
      %s231 = smul.addr %s230, 8
      %s232 = scalar_lea.vmem %s0, %s231
      %p233 = pneg %p38
      %p234 = pneg %p35
      %p235 = pneg %p59
      %p236 = pneg %p56
      %p237 = scmp.lt.s32.totalorder %s17, 1
      %s238 = scalar_select %p237, %s17, 1
      %s239 = smul.addr %s238, 9
      %s240 = smul.addr %s239, 8
      %s241 = scalar_lea.vmem %s2, %s240
      %p242 = pneg %p85
      %p243 = pneg %p82
      %p244 = pneg %p106
      %p245 = pneg %p103
      %p246 = pneg %p127
      %p247 = pneg %p124
      %p248 = pneg %p148
      %p249 = pneg %p145
      %p250 = pneg %p174
      %p251 = pneg %p171
      %p252 = scmp.lt.s32.totalorder %s17, 1
      %s253 = scalar_select %p252, %s17, 1
      %s254 = smul.addr %s253, 8
      %s255 = smul.addr %s254, 8
      %s256 = scalar_lea.vmem %s6, %s255
      %p257 = scmp.lt.s32.totalorder %s17, 1
      %s258 = scalar_select %p257, %s17, 1
      %s259 = smul.addr %s258, 16
      %s260 = smul.addr %s259, 8
      %s261 = scalar_lea.vmem %s0, %s260
      %p262 = scmp.lt.s32.totalorder %s17, 1
      %s263 = scalar_select %p262, %s17, 1
      %s264 = smul.addr %s263, 9
      %s265 = smul.addr %s264, 8
      %s266 = scalar_lea.vmem %s2, %s265
      %p267 = scmp.lt.s32.totalorder %s17, 1
      %s268 = scalar_select %p267, %s17, 1
      %s269 = smul.addr %s268, 8
      %s270 = smul.addr %s269, 8
      %s271 = scalar_lea.vmem %s6, %s270
      %v272 = vld [vmem:[%s261] sm:$0xff]
      %v273 = vld [vmem:[%s261 + $0x8] sm:$0xff]
      %v274 = vld [vmem:[%s261 + $0x10] sm:$0xff]
      %v275 = vld [vmem:[%s261 + $0x18] sm:$0xff]
      %v276 = vld [vmem:[%s261 + $0x20] sm:$0xff]
      %v277 = vld [vmem:[%s261 + $0x28] sm:$0xff]
      %v278 = vld [vmem:[%s261 + $0x30] sm:$0xff]
      %v279 = vld [vmem:[%s261 + $0x38] sm:$0xff]
      %v280 = vld [vmem:[%s261 + $0x40] sm:$0xff]
      %v281 = vld [vmem:[%s261 + $0x48] sm:$0xff]
      %v282 = vld [vmem:[%s261 + $0x50] sm:$0xff]
      %v283 = vld [vmem:[%s261 + $0x58] sm:$0xff]
      %v284 = vld [vmem:[%s261 + $0x60] sm:$0xff]
      %v285 = vld [vmem:[%s261 + $0x68] sm:$0xff]
      %v286 = vld [vmem:[%s261 + $0x70] sm:$0xff]
      %v287 = vld [vmem:[%s261 + $0x78] sm:$0xff]
      %v288 = vld [vmem:[%s1] sm:$0xff]
      %v289 = vld [vmem:[%s1 + $0x8] sm:$0xff]
      %v290 = vld [vmem:[%s1 + $0x10] sm:$0xff]
      %v291 = vld [vmem:[%s1 + $0x18] sm:$0xff]
      %v292 = vld [vmem:[%s1 + $0x20] sm:$0x1f]
      %vm293 = vcmask 302080
      %v295 = vsel %vm293, %v272, 0
      %v298 = vsel %vm293, %v273, 0
      %v301 = vsel %vm293, %v274, 0
      %v304 = vsel %vm293, %v275, 0
      %v307 = vsel %vm293, %v276, 0
      %v310 = vsel %vm293, %v277, 0
      %v313 = vsel %vm293, %v278, 0
      %v316 = vsel %vm293, %v279, 0
      %v319 = vsel %vm293, %v280, 0
      %v322 = vsel %vm293, %v281, 0
      %v325 = vsel %vm293, %v282, 0
      %v328 = vsel %vm293, %v283, 0
      %v331 = vsel %vm293, %v284, 0
      %v334 = vsel %vm293, %v285, 0
      %v337 = vsel %vm293, %v286, 0
      %v340 = vsel %vm293, %v287, 0
      %vm342 = vcmask 1044480
      %v344 = vsel %vm342, %v292, 0
      %346 = vmatprep.subr.mxu0 0.0
      %347 = vmatpush1.msra.mxu0 %v288
      %348 = vmatprep.subr.mxu0 0.0
      %349 = vmatpush1.msra.mxu0 %v289
      %350 = vmatprep.subr.mxu0 0.0
      %351 = vmatpush1.msra.mxu0 %v290
      %352 = vmatprep.subr.mxu0 0.0
      %353 = vmatpush1.msra.mxu0 %v291
      %354 = vmatprep.subr.mxu0 0.0
      %355 = vmatpush1.msra.mxu0 %v344
      %356 = vmatprep.subr.mxu0 0.0
      %357 = vmatpush1.msra.mxu0 0.0
      %358 = vmatprep.subr.mxu0 0.0
      %359 = vmatpush1.msra.mxu0 0.0
      %360 = vmatprep.subr.mxu0 0.0
      %361 = vmatpush1.msra.mxu0 0.0
      %362 = vmatprep.subr.mxu0 0.0
      %363 = vmatpush1.msra.mxu0 0.0
      %364 = vmatprep.subr.mxu0 0.0
      %365 = vmatpush1.msra.mxu0 0.0
      %366 = vmatprep.subr.mxu0 0.0
      %367 = vmatpush1.msra.mxu0 0.0
      %368 = vmatprep.subr.mxu0 0.0
      %369 = vmatpush1.msra.mxu0 0.0
      %370 = vmatprep.subr.mxu0 0.0
      %371 = vmatpush1.msra.mxu0 0.0
      %372 = vmatprep.subr.mxu0 0.0
      %373 = vmatpush1.msra.mxu0 0.0
      %374 = vmatprep.subr.mxu0 0.0
      %375 = vmatpush1.msra.mxu0 0.0
      %376 = vmatprep.subr.mxu0 0.0
      %377 = vmatpush1.msra.mxu0 0.0
      %378 = vmatprep.subr.mxu0 0.0
      %379 = vmatpush1.msra.mxu0 0.0
      %380 = vmatprep.subr.mxu0 0.0
      %381 = vmatpush1.msra.mxu0 0.0
      %382 = vmatprep.subr.mxu0 0.0
      %383 = vmatpush1.msra.mxu0 0.0
      %384 = vmatprep.subr.mxu0 0.0
      %385 = vmatpush1.msra.mxu0 0.0
      %386 = vmatprep.subr.mxu0 0.0
      %387 = vmatpush1.msra.mxu0 0.0
      %388 = vmatprep.subr.mxu0 0.0
      %389 = vmatpush1.msra.mxu0 0.0
      %390 = vmatprep.subr.mxu0 0.0
      %391 = vmatpush1.msra.mxu0 0.0
      %392 = vmatprep.subr.mxu0 0.0
      %393 = vmatpush1.msra.mxu0 0.0
      %394 = vmatprep.subr.mxu0 0.0
      %395 = vmatpush1.msra.mxu0 0.0
      %396 = vmatprep.subr.mxu0 0.0
      %397 = vmatpush1.msra.mxu0 0.0
      %398 = vmatprep.subr.mxu0 0.0
      %399 = vmatpush1.msra.mxu0 0.0
      %400 = vmatprep.subr.mxu0 0.0
      %401 = vmatpush1.msra.mxu0 0.0
      %402 = vmatprep.subr.mxu0 0.0
      %403 = vmatpush1.msra.mxu0 0.0
      %404 = vmatprep.subr.mxu0 0.0
      %405 = vmatpush1.msra.mxu0 0.0
      %406 = vmatprep.subr.mxu0 0.0
      %407 = vmatpush1.msra.mxu0 0.0
      %408 = vmatprep.subr.mxu0 0.0
      %409 = vmatpush1.msra.mxu0 0.0
      %410 = vmatprep.mubr.f32.mxu0 0.0
      %411 = vmatmul.mubr.f32.gmra.mrb[0].mxu0 %v295
      %v412 = vpop.f32.mrb[0].mxu0
      %v413 = vadd.f32 0.0, %v412
      %v414 = vpop.f32.mrb[0].mxu0
      %415 = vmatprep.mubr.f32.mxu0 0.0
      %416 = vmatmul.mubr.f32.gmra.mrb[0].mxu0 %v298
      %v417 = vpop.f32.mrb[0].mxu0
      %v418 = vadd.f32 0.0, %v417
      %v419 = vpop.f32.mrb[0].mxu0
      %420 = vmatprep.mubr.f32.mxu0 0.0
      %421 = vmatmul.mubr.f32.gmra.mrb[0].mxu0 %v301
      %v422 = vpop.f32.mrb[0].mxu0
      %v423 = vadd.f32 0.0, %v422
      %v424 = vpop.f32.mrb[0].mxu0
      %425 = vmatprep.mubr.f32.mxu0 0.0
      %426 = vmatmul.mubr.f32.gmra.mrb[0].mxu0 %v304
      %v427 = vpop.f32.mrb[0].mxu0
      %v428 = vadd.f32 0.0, %v427
      %v429 = vpop.f32.mrb[0].mxu0
      %430 = vmatprep.mubr.f32.mxu0 0.0
      %431 = vmatmul.mubr.f32.gmra.mrb[0].mxu0 %v307
      %v432 = vpop.f32.mrb[0].mxu0
      %v433 = vadd.f32 0.0, %v432
      %v434 = vpop.f32.mrb[0].mxu0
      %435 = vmatprep.mubr.f32.mxu0 0.0
      %436 = vmatmul.mubr.f32.gmra.mrb[0].mxu0 %v310
      %v437 = vpop.f32.mrb[0].mxu0
      %v438 = vadd.f32 0.0, %v437
      %v439 = vpop.f32.mrb[0].mxu0
      %440 = vmatprep.mubr.f32.mxu0 0.0
      %441 = vmatmul.mubr.f32.gmra.mrb[0].mxu0 %v313
      %v442 = vpop.f32.mrb[0].mxu0
      %v443 = vadd.f32 0.0, %v442
      %v444 = vpop.f32.mrb[0].mxu0
      %445 = vmatprep.mubr.f32.mxu0 0.0
      %446 = vmatmul.mubr.f32.gmra.mrb[0].mxu0 %v316
      %v447 = vpop.f32.mrb[0].mxu0
      %v448 = vadd.f32 0.0, %v447
      %v449 = vpop.f32.mrb[0].mxu0
      %450 = vmatprep.mubr.f32.mxu0 0.0
      %451 = vmatmul.mubr.f32.gmra.mrb[0].mxu0 %v319
      %v452 = vpop.f32.mrb[0].mxu0
      %v453 = vadd.f32 0.0, %v452
      %v454 = vpop.f32.mrb[0].mxu0
      %455 = vmatprep.mubr.f32.mxu0 0.0
      %456 = vmatmul.mubr.f32.gmra.mrb[0].mxu0 %v322
      %v457 = vpop.f32.mrb[0].mxu0
      %v458 = vadd.f32 0.0, %v457
      %v459 = vpop.f32.mrb[0].mxu0
      %460 = vmatprep.mubr.f32.mxu0 0.0
      %461 = vmatmul.mubr.f32.gmra.mrb[0].mxu0 %v325
      %v462 = vpop.f32.mrb[0].mxu0
      %v463 = vadd.f32 0.0, %v462
      %v464 = vpop.f32.mrb[0].mxu0
      %465 = vmatprep.mubr.f32.mxu0 0.0
      %466 = vmatmul.mubr.f32.gmra.mrb[0].mxu0 %v328
      %v467 = vpop.f32.mrb[0].mxu0
      %v468 = vadd.f32 0.0, %v467
      %v469 = vpop.f32.mrb[0].mxu0
      %470 = vmatprep.mubr.f32.mxu0 0.0
      %471 = vmatmul.mubr.f32.gmra.mrb[0].mxu0 %v331
      %v472 = vpop.f32.mrb[0].mxu0
      %v473 = vadd.f32 0.0, %v472
      %v474 = vpop.f32.mrb[0].mxu0
      %475 = vmatprep.mubr.f32.mxu0 0.0
      %476 = vmatmul.mubr.f32.gmra.mrb[0].mxu0 %v334
      %v477 = vpop.f32.mrb[0].mxu0
      %v478 = vadd.f32 0.0, %v477
      %v479 = vpop.f32.mrb[0].mxu0
      %480 = vmatprep.mubr.f32.mxu0 0.0
      %481 = vmatmul.mubr.f32.gmra.mrb[0].mxu0 %v337
      %v482 = vpop.f32.mrb[0].mxu0
      %v483 = vadd.f32 0.0, %v482
      %v484 = vpop.f32.mrb[0].mxu0
      %485 = vmatprep.mubr.f32.mxu0 0.0
      %486 = vmatmul.mubr.f32.gmra.mrb[0].mxu0 %v340
      %v487 = vpop.f32.mrb[0].mxu0
      %v488 = vadd.f32 0.0, %v487
      %v489 = vpop.f32.mrb[0].mxu0
      %490 = vdwg.mxu0
      %v491 = vmax.f32 %v413, 0.0
      %v492 = vmax.f32 %v418, 0.0
      %v493 = vmax.f32 %v423, 0.0
      %v494 = vmax.f32 %v428, 0.0
      %v495 = vmax.f32 %v433, 0.0
      %v496 = vmax.f32 %v438, 0.0
      %v497 = vmax.f32 %v443, 0.0
      %v498 = vmax.f32 %v448, 0.0
      %v499 = vmax.f32 %v453, 0.0
      %v500 = vmax.f32 %v458, 0.0
      %v501 = vmax.f32 %v463, 0.0
      %v502 = vmax.f32 %v468, 0.0
      %v503 = vmax.f32 %v473, 0.0
      %v504 = vmax.f32 %v478, 0.0
      %v505 = vmax.f32 %v483, 0.0
      %v506 = vmax.f32 %v488, 0.0
      %vm507 = vcmask 31744
      %v508 = vsel %vm507, %v491, -inf
      %509 = vmax.xlane.f32.xlu0 %v508
      %v510 = vpop.xlane.xlu0 %509
      %v511 = vsel %vm507, %v492, -inf
      %512 = vmax.xlane.f32.xlu0 %v511
      %v513 = vpop.xlane.xlu0 %512
      %v514 = vsel %vm507, %v493, -inf
      %515 = vmax.xlane.f32.xlu0 %v514
      %v516 = vpop.xlane.xlu0 %515
      %v517 = vsel %vm507, %v494, -inf
      %518 = vmax.xlane.f32.xlu0 %v517
      %v519 = vpop.xlane.xlu0 %518
      %v520 = vsel %vm507, %v495, -inf
      %521 = vmax.xlane.f32.xlu0 %v520
      %v522 = vpop.xlane.xlu0 %521
      %v523 = vsel %vm507, %v496, -inf
      %524 = vmax.xlane.f32.xlu0 %v523
      %v525 = vpop.xlane.xlu0 %524
      %v526 = vsel %vm507, %v497, -inf
      %527 = vmax.xlane.f32.xlu0 %v526
      %v528 = vpop.xlane.xlu0 %527
      %v529 = vsel %vm507, %v498, -inf
      %530 = vmax.xlane.f32.xlu0 %v529
      %v531 = vpop.xlane.xlu0 %530
      %v532 = vsel %vm507, %v499, -inf
      %533 = vmax.xlane.f32.xlu0 %v532
      %v534 = vpop.xlane.xlu0 %533
      %v535 = vsel %vm507, %v500, -inf
      %536 = vmax.xlane.f32.xlu0 %v535
      %v537 = vpop.xlane.xlu0 %536
      %v538 = vsel %vm507, %v501, -inf
      %539 = vmax.xlane.f32.xlu0 %v538
      %v540 = vpop.xlane.xlu0 %539
      %v541 = vsel %vm507, %v502, -inf
      %542 = vmax.xlane.f32.xlu0 %v541
      %v543 = vpop.xlane.xlu0 %542
      %v544 = vsel %vm507, %v503, -inf
      %545 = vmax.xlane.f32.xlu0 %v544
      %v546 = vpop.xlane.xlu0 %545
      %v547 = vsel %vm507, %v504, -inf
      %548 = vmax.xlane.f32.xlu0 %v547
      %v549 = vpop.xlane.xlu0 %548
      %v550 = vsel %vm507, %v505, -inf
      %551 = vmax.xlane.f32.xlu0 %v550
      %v552 = vpop.xlane.xlu0 %551
      %v553 = vsel %vm507, %v506, -inf
      %554 = vmax.xlane.f32.xlu0 %v553
      %v555 = vpop.xlane.xlu0 %554
      %v556 = vsub.f32 %v491, %v510
      %v557 = vsub.f32 %v492, %v513
      %v558 = vsub.f32 %v493, %v516
      %v559 = vsub.f32 %v494, %v519
      %v560 = vsub.f32 %v495, %v522
      %v561 = vsub.f32 %v496, %v525
      %v562 = vsub.f32 %v497, %v528
      %v563 = vsub.f32 %v498, %v531
      %v564 = vsub.f32 %v499, %v534
      %v565 = vsub.f32 %v500, %v537
      %v566 = vsub.f32 %v501, %v540
      %v567 = vsub.f32 %v502, %v543
      %v568 = vsub.f32 %v503, %v546
      %v569 = vsub.f32 %v504, %v549
      %v570 = vsub.f32 %v505, %v552
      %v571 = vsub.f32 %v506, %v555
      %v572 = vmul.f32 %v556, 1.442695
      %v573 = vpow.pop %v572
      %v574 = vmul.f32 %v557, 1.442695
      %v575 = vpow.pop %v574
      %v576 = vmul.f32 %v558, 1.442695
      %v577 = vpow.pop %v576
      %v578 = vmul.f32 %v559, 1.442695
      %v579 = vpow.pop %v578
      %v580 = vmul.f32 %v560, 1.442695
      %v581 = vpow.pop %v580
      %v582 = vmul.f32 %v561, 1.442695
      %v583 = vpow.pop %v582
      %v584 = vmul.f32 %v562, 1.442695
      %v585 = vpow.pop %v584
      %v586 = vmul.f32 %v563, 1.442695
      %v587 = vpow.pop %v586
      %v588 = vmul.f32 %v564, 1.442695
      %v589 = vpow.pop %v588
      %v590 = vmul.f32 %v565, 1.442695
      %v591 = vpow.pop %v590
      %v592 = vmul.f32 %v566, 1.442695
      %v593 = vpow.pop %v592
      %v594 = vmul.f32 %v567, 1.442695
      %v595 = vpow.pop %v594
      %v596 = vmul.f32 %v568, 1.442695
      %v597 = vpow.pop %v596
      %v598 = vmul.f32 %v569, 1.442695
      %v599 = vpow.pop %v598
      %v600 = vmul.f32 %v570, 1.442695
      %v601 = vpow.pop %v600
      %v602 = vmul.f32 %v571, 1.442695
      %v603 = vpow.pop %v602
      %v604 = vsel %vm507, %v573, 0.0
      %605 = vadd.xlane.f32.xlu0 %v604
      %v606 = vpop.xlane.xlu0 %605
      %v607 = vsel %vm507, %v575, 0.0
      %608 = vadd.xlane.f32.xlu0 %v607
      %v609 = vpop.xlane.xlu0 %608
      %v610 = vsel %vm507, %v577, 0.0
      %611 = vadd.xlane.f32.xlu0 %v610
      %v612 = vpop.xlane.xlu0 %611
      %v613 = vsel %vm507, %v579, 0.0
      %614 = vadd.xlane.f32.xlu0 %v613
      %v615 = vpop.xlane.xlu0 %614
      %v616 = vsel %vm507, %v581, 0.0
      %617 = vadd.xlane.f32.xlu0 %v616
      %v618 = vpop.xlane.xlu0 %617
      %v619 = vsel %vm507, %v583, 0.0
      %620 = vadd.xlane.f32.xlu0 %v619
      %v621 = vpop.xlane.xlu0 %620
      %v622 = vsel %vm507, %v585, 0.0
      %623 = vadd.xlane.f32.xlu0 %v622
      %v624 = vpop.xlane.xlu0 %623
      %v625 = vsel %vm507, %v587, 0.0
      %626 = vadd.xlane.f32.xlu0 %v625
      %v627 = vpop.xlane.xlu0 %626
      %v628 = vsel %vm507, %v589, 0.0
      %629 = vadd.xlane.f32.xlu0 %v628
      %v630 = vpop.xlane.xlu0 %629
      %v631 = vsel %vm507, %v591, 0.0
      %632 = vadd.xlane.f32.xlu0 %v631
      %v633 = vpop.xlane.xlu0 %632
      %v634 = vsel %vm507, %v593, 0.0
      %635 = vadd.xlane.f32.xlu0 %v634
      %v636 = vpop.xlane.xlu0 %635
      %v637 = vsel %vm507, %v595, 0.0
      %638 = vadd.xlane.f32.xlu0 %v637
      %v639 = vpop.xlane.xlu0 %638
      %v640 = vsel %vm507, %v597, 0.0
      %641 = vadd.xlane.f32.xlu0 %v640
      %v642 = vpop.xlane.xlu0 %641
      %v643 = vsel %vm507, %v599, 0.0
      %644 = vadd.xlane.f32.xlu0 %v643
      %v645 = vpop.xlane.xlu0 %644
      %v646 = vsel %vm507, %v601, 0.0
      %647 = vadd.xlane.f32.xlu0 %v646
      %v648 = vpop.xlane.xlu0 %647
      %v649 = vsel %vm507, %v603, 0.0
      %650 = vadd.xlane.f32.xlu0 %v649
      %v651 = vpop.xlane.xlu0 %650
      %v652 = vrcp.pop %v606
      %v653 = vrcp.pop %v609
      %v654 = vrcp.pop %v612
      %v655 = vrcp.pop %v615
      %v656 = vrcp.pop %v618
      %v657 = vrcp.pop %v621
      %v658 = vrcp.pop %v624
      %v659 = vrcp.pop %v627
      %v660 = vrcp.pop %v630
      %v661 = vrcp.pop %v633
      %v662 = vrcp.pop %v636
      %v663 = vrcp.pop %v639
      %v664 = vrcp.pop %v642
      %v665 = vrcp.pop %v645
      %v666 = vrcp.pop %v648
      %v667 = vrcp.pop %v651
      %v668 = vmul.f32 %v573, %v652
      %v669 = vmul.f32 %v575, %v653
      %v670 = vmul.f32 %v577, %v654
      %v671 = vmul.f32 %v579, %v655
      %v672 = vmul.f32 %v581, %v656
      %v673 = vmul.f32 %v583, %v657
      %v674 = vmul.f32 %v585, %v658
      %v675 = vmul.f32 %v587, %v659
      %v676 = vmul.f32 %v589, %v660
      %v677 = vmul.f32 %v591, %v661
      %v678 = vmul.f32 %v593, %v662
      %v679 = vmul.f32 %v595, %v663
      %v680 = vmul.f32 %v597, %v664
      %v681 = vmul.f32 %v599, %v665
      %v682 = vmul.f32 %v601, %v666
      %v683 = vmul.f32 %v603, %v667
      %692 = vrot.lane.b32.xlu0 %v676, 4
      %v693 = vpop.permute.xlu0 %692
      %694 = vrot.lane.b32.xlu0 %v677, 4
      %v695 = vpop.permute.xlu0 %694
      %696 = vrot.lane.b32.xlu0 %v678, 4
      %v697 = vpop.permute.xlu0 %696
      %698 = vrot.lane.b32.xlu0 %v679, 4
      %v699 = vpop.permute.xlu0 %698
      %700 = vrot.lane.b32.xlu0 %v680, 4
      %v701 = vpop.permute.xlu0 %700
      %702 = vrot.lane.b32.xlu0 %v681, 4
      %v703 = vpop.permute.xlu0 %702
      %704 = vrot.lane.b32.xlu0 %v682, 4
      %v705 = vpop.permute.xlu0 %704
      %706 = vrot.lane.b32.xlu0 %v683, 4
      %v707 = vpop.permute.xlu0 %706
      %v716 = vsel %vm507, %v668, %v693
      %v717 = vsel %vm507, %v669, %v695
      %v718 = vsel %vm507, %v670, %v697
      %v719 = vsel %vm507, %v671, %v699
      %v720 = vsel %vm507, %v672, %v701
      %v721 = vsel %vm507, %v673, %v703
      %v722 = vsel %vm507, %v674, %v705
      %v723 = vsel %vm507, %v675, %v707
      %v724 = vld [vmem:[%s3] sm:$0xff]
      %v725 = vld [vmem:[%s3 + $0x8] sm:$0xff]
      %v726 = vld [vmem:[%s3 + $0x10] sm:$0xff]
      %v727 = vld [vmem:[%s3 + $0x18] sm:$0xff]
      %v728 = vld [vmem:[%s3 + $0x20] sm:$0xff]
      %v729 = vld [vmem:[%s3 + $0x28] sm:$0xff]
      %v730 = vld [vmem:[%s3 + $0x30] sm:$0xff]
      %v731 = vld [vmem:[%s3 + $0x38] sm:$0xff]
      %v732 = vld [vmem:[%s266] sm:$0xff]
      %v733 = vld [vmem:[%s266 + $0x8] sm:$0xff]
      %v734 = vld [vmem:[%s266 + $0x10] sm:$0xff]
      %v735 = vld [vmem:[%s266 + $0x18] sm:$0xff]
      %v736 = vld [vmem:[%s266 + $0x20] sm:$0xff]
      %v737 = vld [vmem:[%s266 + $0x28] sm:$0xff]
      %v738 = vld [vmem:[%s266 + $0x30] sm:$0xff]
      %v739 = vld [vmem:[%s266 + $0x38] sm:$0xff]
      %v740 = vld [vmem:[%s266 + $0x40] sm:$0x1]
      %vm741 = vcmask 531456
      %v743 = vsel %vm741, %v724, 0
      %v746 = vsel %vm741, %v725, 0
      %v749 = vsel %vm741, %v726, 0
      %v752 = vsel %vm741, %v727, 0
      %v755 = vsel %vm741, %v728, 0
      %v758 = vsel %vm741, %v729, 0
      %v761 = vsel %vm741, %v730, 0
      %v764 = vsel %vm741, %v731, 0
      %vm766 = vcmask 1040384
      %v768 = vsel %vm766, %v740, 0
      %770 = vmatprep.subr.mxu0 0.0
      %771 = vmatpush1.msra.mxu0 %v732
      %772 = vmatprep.subr.mxu0 0.0
      %773 = vmatpush1.msra.mxu0 %v733
      %774 = vmatprep.subr.mxu0 0.0
      %775 = vmatpush1.msra.mxu0 %v734
      %776 = vmatprep.subr.mxu0 0.0
      %777 = vmatpush1.msra.mxu0 %v735
      %778 = vmatprep.subr.mxu0 0.0
      %779 = vmatpush1.msra.mxu0 %v736
      %780 = vmatprep.subr.mxu0 0.0
      %781 = vmatpush1.msra.mxu0 %v737
      %782 = vmatprep.subr.mxu0 0.0
      %783 = vmatpush1.msra.mxu0 %v738
      %784 = vmatprep.subr.mxu0 0.0
      %785 = vmatpush1.msra.mxu0 %v739
      %786 = vmatprep.subr.mxu0 0.0
      %787 = vmatpush1.msra.mxu0 %v768
      %788 = vmatprep.subr.mxu0 0.0
      %789 = vmatpush1.msra.mxu0 0.0
      %790 = vmatprep.subr.mxu0 0.0
      %791 = vmatpush1.msra.mxu0 0.0
      %792 = vmatprep.subr.mxu0 0.0
      %793 = vmatpush1.msra.mxu0 0.0
      %794 = vmatprep.subr.mxu0 0.0
      %795 = vmatpush1.msra.mxu0 0.0
      %796 = vmatprep.subr.mxu0 0.0
      %797 = vmatpush1.msra.mxu0 0.0
      %798 = vmatprep.subr.mxu0 0.0
      %799 = vmatpush1.msra.mxu0 0.0
      %800 = vmatprep.subr.mxu0 0.0
      %801 = vmatpush1.msra.mxu0 0.0
      %802 = vmatprep.subr.mxu0 0.0
      %803 = vmatpush1.msra.mxu0 0.0
      %804 = vmatprep.subr.mxu0 0.0
      %805 = vmatpush1.msra.mxu0 0.0
      %806 = vmatprep.subr.mxu0 0.0
      %807 = vmatpush1.msra.mxu0 0.0
      %808 = vmatprep.subr.mxu0 0.0
      %809 = vmatpush1.msra.mxu0 0.0
      %810 = vmatprep.subr.mxu0 0.0
      %811 = vmatpush1.msra.mxu0 0.0
      %812 = vmatprep.subr.mxu0 0.0
      %813 = vmatpush1.msra.mxu0 0.0
      %814 = vmatprep.subr.mxu0 0.0
      %815 = vmatpush1.msra.mxu0 0.0
      %816 = vmatprep.subr.mxu0 0.0
      %817 = vmatpush1.msra.mxu0 0.0
      %818 = vmatprep.subr.mxu0 0.0
      %819 = vmatpush1.msra.mxu0 0.0
      %820 = vmatprep.subr.mxu0 0.0
      %821 = vmatpush1.msra.mxu0 0.0
      %822 = vmatprep.subr.mxu0 0.0
      %823 = vmatpush1.msra.mxu0 0.0
      %824 = vmatprep.subr.mxu0 0.0
      %825 = vmatpush1.msra.mxu0 0.0
      %826 = vmatprep.subr.mxu0 0.0
      %827 = vmatpush1.msra.mxu0 0.0
      %828 = vmatprep.subr.mxu0 0.0
      %829 = vmatpush1.msra.mxu0 0.0
      %830 = vmatprep.subr.mxu0 0.0
      %831 = vmatpush1.msra.mxu0 0.0
      %832 = vmatprep.subr.mxu0 0.0
      %833 = vmatpush1.msra.mxu0 0.0
      %834 = vmatprep.mubr.f32.mxu0 0.0
      %835 = vmatmul.mubr.f32.gmra.mrb[0].mxu0 %v743
      %v836 = vpop.f32.mrb[0].mxu0
      %v837 = vadd.f32 0.0, %v836
      %v838 = vpop.f32.mrb[0].mxu0
      %839 = vmatprep.mubr.f32.mxu0 0.0
      %840 = vmatmul.mubr.f32.gmra.mrb[0].mxu0 %v746
      %v841 = vpop.f32.mrb[0].mxu0
      %v842 = vadd.f32 0.0, %v841
      %v843 = vpop.f32.mrb[0].mxu0
      %844 = vmatprep.mubr.f32.mxu0 0.0
      %845 = vmatmul.mubr.f32.gmra.mrb[0].mxu0 %v749
      %v846 = vpop.f32.mrb[0].mxu0
      %v847 = vadd.f32 0.0, %v846
      %v848 = vpop.f32.mrb[0].mxu0
      %849 = vmatprep.mubr.f32.mxu0 0.0
      %850 = vmatmul.mubr.f32.gmra.mrb[0].mxu0 %v752
      %v851 = vpop.f32.mrb[0].mxu0
      %v852 = vadd.f32 0.0, %v851
      %v853 = vpop.f32.mrb[0].mxu0
      %854 = vmatprep.mubr.f32.mxu0 0.0
      %855 = vmatmul.mubr.f32.gmra.mrb[0].mxu0 %v755
      %v856 = vpop.f32.mrb[0].mxu0
      %v857 = vadd.f32 0.0, %v856
      %v858 = vpop.f32.mrb[0].mxu0
      %859 = vmatprep.mubr.f32.mxu0 0.0
      %860 = vmatmul.mubr.f32.gmra.mrb[0].mxu0 %v758
      %v861 = vpop.f32.mrb[0].mxu0
      %v862 = vadd.f32 0.0, %v861
      %v863 = vpop.f32.mrb[0].mxu0
      %864 = vmatprep.mubr.f32.mxu0 0.0
      %865 = vmatmul.mubr.f32.gmra.mrb[0].mxu0 %v761
      %v866 = vpop.f32.mrb[0].mxu0
      %v867 = vadd.f32 0.0, %v866
      %v868 = vpop.f32.mrb[0].mxu0
      %869 = vmatprep.mubr.f32.mxu0 0.0
      %870 = vmatmul.mubr.f32.gmra.mrb[0].mxu0 %v764
      %v871 = vpop.f32.mrb[0].mxu0
      %v872 = vadd.f32 0.0, %v871
      %v873 = vpop.f32.mrb[0].mxu0
      %874 = vdwg.mxu0
      %v875 = vmax.f32 %v837, 0.0
      %v876 = vmax.f32 %v842, 0.0
      %v877 = vmax.f32 %v847, 0.0
      %v878 = vmax.f32 %v852, 0.0
      %v879 = vmax.f32 %v857, 0.0
      %v880 = vmax.f32 %v862, 0.0
      %v881 = vmax.f32 %v867, 0.0
      %v882 = vmax.f32 %v872, 0.0
      %v883 = vld [vmem:[%s4] sm:$0xff]
      %v884 = vld [vmem:[%s5] sm:$0x1]
      %v886 = vlaneseq
      %v887 = vshrl.u32 %v886, 7
      %v888 = vsub.s32 0, %v887
      %v889 = vrot.slane %v884, %v888
      %vm891 = vcmask 64512
      %v893 = vsel %vm891, %v875, 0
      %v896 = vsel %vm891, %v876, 0
      %v899 = vsel %vm891, %v877, 0
      %v902 = vsel %vm891, %v878, 0
      %v905 = vsel %vm891, %v879, 0
      %v908 = vsel %vm891, %v880, 0
      %v911 = vsel %vm891, %v881, 0
      %v914 = vsel %vm891, %v882, 0
      %916 = vmatprep.subr.mxu0 0.0
      %917 = vmatpush1.msra.mxu0 %v883
      %918 = vmatprep.subr.mxu0 0.0
      %919 = vmatpush1.msra.mxu0 0.0
      %920 = vmatprep.subr.mxu0 0.0
      %921 = vmatpush1.msra.mxu0 0.0
      %922 = vmatprep.subr.mxu0 0.0
      %923 = vmatpush1.msra.mxu0 0.0
      %924 = vmatprep.subr.mxu0 0.0
      %925 = vmatpush1.msra.mxu0 0.0
      %926 = vmatprep.subr.mxu0 0.0
      %927 = vmatpush1.msra.mxu0 0.0
      %928 = vmatprep.subr.mxu0 0.0
      %929 = vmatpush1.msra.mxu0 0.0
      %930 = vmatprep.subr.mxu0 0.0
      %931 = vmatpush1.msra.mxu0 0.0
      %932 = vmatprep.subr.mxu0 0.0
      %933 = vmatpush1.msra.mxu0 0.0
      %934 = vmatprep.subr.mxu0 0.0
      %935 = vmatpush1.msra.mxu0 0.0
      %936 = vmatprep.subr.mxu0 0.0
      %937 = vmatpush1.msra.mxu0 0.0
      %938 = vmatprep.subr.mxu0 0.0
      %939 = vmatpush1.msra.mxu0 0.0
      %940 = vmatprep.subr.mxu0 0.0
      %941 = vmatpush1.msra.mxu0 0.0
      %942 = vmatprep.subr.mxu0 0.0
      %943 = vmatpush1.msra.mxu0 0.0
      %944 = vmatprep.subr.mxu0 0.0
      %945 = vmatpush1.msra.mxu0 0.0
      %946 = vmatprep.subr.mxu0 0.0
      %947 = vmatpush1.msra.mxu0 0.0
      %948 = vmatprep.subr.mxu0 0.0
      %949 = vmatpush1.msra.mxu0 0.0
      %950 = vmatprep.subr.mxu0 0.0
      %951 = vmatpush1.msra.mxu0 0.0
      %952 = vmatprep.subr.mxu0 0.0
      %953 = vmatpush1.msra.mxu0 0.0
      %954 = vmatprep.subr.mxu0 0.0
      %955 = vmatpush1.msra.mxu0 0.0
      %956 = vmatprep.subr.mxu0 0.0
      %957 = vmatpush1.msra.mxu0 0.0
      %958 = vmatprep.subr.mxu0 0.0
      %959 = vmatpush1.msra.mxu0 0.0
      %960 = vmatprep.subr.mxu0 0.0
      %961 = vmatpush1.msra.mxu0 0.0
      %962 = vmatprep.subr.mxu0 0.0
      %963 = vmatpush1.msra.mxu0 0.0
      %964 = vmatprep.subr.mxu0 0.0
      %965 = vmatpush1.msra.mxu0 0.0
      %966 = vmatprep.subr.mxu0 0.0
      %967 = vmatpush1.msra.mxu0 0.0
      %968 = vmatprep.subr.mxu0 0.0
      %969 = vmatpush1.msra.mxu0 0.0
      %970 = vmatprep.subr.mxu0 0.0
      %971 = vmatpush1.msra.mxu0 0.0
      %972 = vmatprep.subr.mxu0 0.0
      %973 = vmatpush1.msra.mxu0 0.0
      %974 = vmatprep.subr.mxu0 0.0
      %975 = vmatpush1.msra.mxu0 0.0
      %976 = vmatprep.subr.mxu0 0.0
      %977 = vmatpush1.msra.mxu0 0.0
      %978 = vmatprep.subr.mxu0 0.0
      %979 = vmatpush1.msra.mxu0 0.0
      %980 = vmatprep.mubr.f32.mxu0 0.0
      %981 = vmatmul.mubr.f32.gmra.mrb[0].mxu0 %v893
      %v982 = vpop.f32.mrb[0].mxu0
      %v983 = vadd.f32 %v889, %v982
      %v984 = vpop.f32.mrb[0].mxu0
      %985 = vmatprep.mubr.f32.mxu0 0.0
      %986 = vmatmul.mubr.f32.gmra.mrb[0].mxu0 %v896
      %v987 = vpop.f32.mrb[0].mxu0
      %v988 = vadd.f32 %v889, %v987
      %v989 = vpop.f32.mrb[0].mxu0
      %990 = vmatprep.mubr.f32.mxu0 0.0
      %991 = vmatmul.mubr.f32.gmra.mrb[0].mxu0 %v899
      %v992 = vpop.f32.mrb[0].mxu0
      %v993 = vadd.f32 %v889, %v992
      %v994 = vpop.f32.mrb[0].mxu0
      %995 = vmatprep.mubr.f32.mxu0 0.0
      %996 = vmatmul.mubr.f32.gmra.mrb[0].mxu0 %v902
      %v997 = vpop.f32.mrb[0].mxu0
      %v998 = vadd.f32 %v889, %v997
      %v999 = vpop.f32.mrb[0].mxu0
      %1000 = vmatprep.mubr.f32.mxu0 0.0
      %1001 = vmatmul.mubr.f32.gmra.mrb[0].mxu0 %v905
      %v1002 = vpop.f32.mrb[0].mxu0
      %v1003 = vadd.f32 %v889, %v1002
      %v1004 = vpop.f32.mrb[0].mxu0
      %1005 = vmatprep.mubr.f32.mxu0 0.0
      %1006 = vmatmul.mubr.f32.gmra.mrb[0].mxu0 %v908
      %v1007 = vpop.f32.mrb[0].mxu0
      %v1008 = vadd.f32 %v889, %v1007
      %v1009 = vpop.f32.mrb[0].mxu0
      %1010 = vmatprep.mubr.f32.mxu0 0.0
      %1011 = vmatmul.mubr.f32.gmra.mrb[0].mxu0 %v911
      %v1012 = vpop.f32.mrb[0].mxu0
      %v1013 = vadd.f32 %v889, %v1012
      %v1014 = vpop.f32.mrb[0].mxu0
      %1015 = vmatprep.mubr.f32.mxu0 0.0
      %1016 = vmatmul.mubr.f32.gmra.mrb[0].mxu0 %v914
      %v1017 = vpop.f32.mrb[0].mxu0
      %v1018 = vadd.f32 %v889, %v1017
      %v1019 = vpop.f32.mrb[0].mxu0
      %1020 = vdwg.mxu0
      %v1021 = vmax.f32 %v983, 0.0
      %v1022 = vmax.f32 %v988, 0.0
      %v1023 = vmax.f32 %v993, 0.0
      %v1024 = vmax.f32 %v998, 0.0
      %v1025 = vmax.f32 %v1003, 0.0
      %v1026 = vmax.f32 %v1008, 0.0
      %v1027 = vmax.f32 %v1013, 0.0
      %v1028 = vmax.f32 %v1018, 0.0
      %v1029 = vmul.f32 %v716, %v1021
      %v1030 = vmul.f32 %v717, %v1022
      %v1031 = vmul.f32 %v718, %v1023
      %v1032 = vmul.f32 %v719, %v1024
      %v1033 = vmul.f32 %v720, %v1025
      %v1034 = vmul.f32 %v721, %v1026
      %v1035 = vmul.f32 %v722, %v1027
      %v1036 = vmul.f32 %v723, %v1028
      %1037 = vst.msk [vmem:[%s271] sm:$0xff] %vm891, %v1029
      %1038 = vst.msk [vmem:[%s271 + $0x8] sm:$0xff] %vm891, %v1030
      %1039 = vst.msk [vmem:[%s271 + $0x10] sm:$0xff] %vm891, %v1031
      %1040 = vst.msk [vmem:[%s271 + $0x18] sm:$0xff] %vm891, %v1032
      %1041 = vst.msk [vmem:[%s271 + $0x20] sm:$0xff] %vm891, %v1033
      %1042 = vst.msk [vmem:[%s271 + $0x28] sm:$0xff] %vm891, %v1034
      %1043 = vst.msk [vmem:[%s271 + $0x30] sm:$0xff] %vm891, %v1035
      %1044 = vst.msk [vmem:[%s271 + $0x38] sm:$0xff] %vm891, %v1036
      %p1045 = scmp.lt.s32.totalorder %s17, 1
      %s1046 = scalar_select %p1045, %s17, 1
      %s1047 = smul.addr %s1046, 8
      %s1048 = smul.addr %s1047, 8
      %s1049 = scalar_lea.vmem %s6, %s1048
      // Predicated region
      $region45: #{tpu_custom_call.1} parent=43 // pred_check
        %p1050 = pneg %p171
      $region46: #{tpu_custom_call.1} parent=43 // pred_check_branch
        %1052 = sbr.rel (%p1050) target = $region48
      $region47: #{tpu_custom_call.1} parent=43 // pred_region
        _
      $region48: #{tpu_custom_call.1} parent=43 // pred_fallthru
        _
    $region44: #{tpu_custom_call.1} parent=5 // pred_fallthru
      _
    %p1053 = scmp.le.s32.totalorder 2, %s12
    // Predicated region
    $region49: #{tpu_custom_call.1} parent=5 // pred_check
      %p1054 = pneg %p1053
    $region50: #{tpu_custom_call.1} parent=5 // pred_check_branch
      %1056 = sbr.rel (%p1054) target = $region52
    $region51: #{tpu_custom_call.1} parent=5 // pred_region
      %s1057 = ssub.s32 %s12, 2
      // Predicated region
      $region53: #{tpu_custom_call.1} parent=51 // pred_check
        %p1058 = pneg %p177
      $region54: #{tpu_custom_call.1} parent=51 // pred_check_branch
        %1060 = sbr.rel (%p1058) target = $region56
      $region55: #{tpu_custom_call.1} parent=51 // pred_region
        %p1061 = scmp.lt.s32.totalorder %s18, 1
        %s1062 = scalar_select %p1061, %s18, 1
        %s1063 = smul.addr %s1062, 8
        %s1064 = smul.addr %s1063, 8
        %s1065 = scalar_lea.vmem %s6, %s1064
      $region56: #{tpu_custom_call.1} parent=51 // pred_fallthru
        _
    $region52: #{tpu_custom_call.1} parent=5 // pred_fallthru
      _
  $region6: #{tpu_custom_call.1} parent=0 // loop_footer
    %s16 = sadd.s32 1, %s12
  $region7: #{tpu_custom_call.1} parent=0 // loop_footer_branch
    %11 = sbr.rel target = $region3
  $region8: #{tpu_custom_call.1} parent=0 // loop_exit
    _

</llo_original>
